<compile_context>
chip_gen: v5e
topology: v5e:2x2
jax: 0.10.0
libtpu: 0.0.40
codegen_flags: <defaults>
</compile_context>

<pallas_src>
import functools
import math

import jax
import jax.numpy as jnp
from jax import lax
from jax.experimental import pallas as pl
from jax.experimental.pallas import tpu as pltpu


def _layernorm(v, gamma, beta, eps):
    # f32 elementwise math (keep: v5e VPU/EUP have no bf16 path).
    mu = jnp.mean(v, axis=-1, keepdims=True)
    var = jnp.mean(jnp.square(v - mu), axis=-1, keepdims=True)
    return (v - mu) * lax.rsqrt(var + eps) * gamma + beta


def _encoder_layer_kernel(
    x_ref,       # (S*B, D) f32   token slab, token t = s*B + b
    wqkv_ref,    # (D, 3D)  bf16  fused QKV weight, 1/sqrt(hd) folded into Q columns
    wo_ref,      # (D, D)   bf16  out-projection, (in, out) layout
    w1_ref,      # (D, F)   bf16
    w2_ref,      # (F, D)   bf16
    vec_ref,     # (8, W)   f32   rows: bqkv | bo | b1 | b2 | g1 | be1 | g2 | be2
    o_ref,       # (S*B, D) f32
    *, nhead, batch, eps,
):
    SB, D = x_ref.shape
    hd = D // nhead
    F = w1_ref.shape[1]
    f32, bf16 = jnp.float32, jnp.bfloat16

    # Small packed parameter block (one vreg-sized read, static slices).
    vec = vec_ref[...]
    bqkv = vec[0:1, :3 * D]
    bo = vec[1:2, :D]
    b1 = vec[2:3, :F]
    b2 = vec[3:4, :D]
    g1 = vec[4:5, :D]
    be1 = vec[5:6, :D]
    g2 = vec[6:7, :D]
    be2 = vec[7:8, :D]

    x = x_ref[...]                                              # (S*B, D) f32

    # ---- LayerNorm1 + fused QKV projection (one 3D-wide MXU matmul) -----------
    h = _layernorm(x, g1, be1, eps)
    qkv = jnp.dot(h.astype(bf16), wqkv_ref[...],
                  preferred_element_type=f32) + bqkv            # (S*B, 3D) f32
    qb = qkv[:, 0:D].astype(bf16)                               # scale already folded in
    kb = qkv[:, D:2 * D].astype(bf16)
    vb = qkv[:, 2 * D:3 * D].astype(bf16)

    # ---- cross-batch key mask: token t belongs to batch (t % B) ---------------
    if batch > 1:
        rows = lax.broadcasted_iota(jnp.int32, (SB, SB), 0)
        cols = lax.broadcasted_iota(jnp.int32, (SB, SB), 1)
        same_batch = (rows % batch) == (cols % batch)
    else:
        same_batch = None

    # ---- per-head attention on the whole token slab ---------------------------
    ctx_heads = []
    for hh in range(nhead):
        sl = slice(hh * hd, (hh + 1) * hd)
        s = lax.dot_general(qb[:, sl], kb[:, sl],
                            (((1,), (1,)), ((), ())),
                            preferred_element_type=f32)         # (S*B, S*B) f32
        if same_batch is not None:
            s = jnp.where(same_batch, s, jnp.float32(-1e30))
        s = s - jnp.max(s, axis=-1, keepdims=True)
        p = jnp.exp(s)
        p = p * pl.reciprocal(jnp.sum(p, axis=-1, keepdims=True), approx=True)
        ctx_heads.append(
            jnp.dot(p.astype(bf16), vb[:, sl],
                    preferred_element_type=f32).astype(bf16))   # (S*B, hd)

    # Head concat along lanes + single out-projection matmul: the head reduction
    # happens inside the MXU f32 accumulator (no VPU sum over an (H,S,D) tensor).
    ctx = jnp.concatenate(ctx_heads, axis=-1)                   # (S*B, D) bf16
    attn = jnp.dot(ctx, wo_ref[...], preferred_element_type=f32) + bo

    # ---- residual + post-norm1, FFN, residual + norm2 --------------------------
    x1 = _layernorm(x + attn, g1, be1, eps)
    ff = jnp.dot(x1.astype(bf16), w1_ref[...], preferred_element_type=f32) + b1
    ff = jnp.maximum(ff, 0.0)                                   # ReLU
    ff = jnp.dot(ff.astype(bf16), w2_ref[...], preferred_element_type=f32) + b2
    o_ref[...] = _layernorm(x1 + ff, g2, be2, eps)              # dense full-block store


def dev_transformer_encoder_layer(src, params, *, nhead, eps=1e-5):
    """src: (S, B, D) float32 (batch_first=False). Returns (S, B, D) float32."""
    S, B, D = src.shape
    hd = D // nhead
    F = params["w1"].shape[0]
    scale = 1.0 / math.sqrt(hd)
    f32, bf16 = jnp.float32, jnp.bfloat16

    # One-time constant folding / repack (weights only; no per-call activation work):
    #   * transpose to (in, out) layouts
    #   * fold 1/sqrt(hd) into the Q columns of Wqkv and into the Q bias
    #   * pack all small vectors into one (8, W) f32 block.
    wqkv_t = params["wqkv"].astype(f32).T                       # (D, 3D)
    col_scale = jnp.concatenate(
        [jnp.full((D,), scale, f32), jnp.ones((2 * D,), f32)])
    wqkv = (wqkv_t * col_scale[None, :]).astype(bf16)
    wo = params["wo"].astype(f32).T.astype(bf16)                # (D, D)
    w1 = params["w1"].astype(f32).T.astype(bf16)                # (D, F)
    w2 = params["w2"].astype(f32).T.astype(bf16)                # (F, D)

    bqkv = params["bqkv"].astype(f32)
    bqkv = jnp.concatenate([bqkv[:D] * scale, bqkv[D:]])        # fold scale into bq

    W = max(3 * D, F)

    def row(v):
        v = v.astype(f32).reshape(-1)
        return jnp.pad(v, (0, W - v.shape[0]))

    vecs = jnp.stack([
        row(bqkv), row(params["bo"]), row(params["b1"]), row(params["b2"]),
        row(params["g1"]), row(params["be1"]), row(params["g2"]), row(params["be2"]),
    ])                                                          # (8, W) f32

    # Free row-major collapse (no transpose / data movement in HBM).
    x2d = src.astype(f32).reshape(S * B, D)

    kernel = functools.partial(_encoder_layer_kernel, nhead=nhead, batch=B, eps=eps)
    vmem = pl.BlockSpec(memory_space=pltpu.MemorySpace.VMEM)

    out = pl.pallas_call(
        kernel,
        out_shape=jax.ShapeDtypeStruct((S * B, D), f32),
        in_specs=[vmem] * 6,
        out_specs=vmem,
    )(x2d, wqkv, wo, w1, w2, vecs)
    return out.reshape(S, B, D)


def _reference(src, params, *, nhead, eps=1e-5):
    """Pure-JAX reference (same math + same bf16 matmul-operand casts as the kernel)."""
    S, B, D = src.shape
    hd = D // nhead
    scale = 1.0 / math.sqrt(hd)
    f32, bf16 = jnp.float32, jnp.bfloat16

    def ln(v, g, b):
        mu = jnp.mean(v, -1, keepdims=True)
        var = jnp.mean(jnp.square(v - mu), -1, keepdims=True)
        return (v - mu) * lax.rsqrt(var + eps) * g + b

    def mm(a, w_t, b):
        return jnp.einsum('...k,kn->...n', a.astype(bf16), w_t.astype(bf16),
                          preferred_element_type=f32) + b

    x = jnp.transpose(src, (1, 0, 2))                           # (B, S, D)
    h = ln(x, params["g1"], params["be1"])
    qkv = mm(h, params["wqkv"].T, params["bqkv"])
    q, k, v = jnp.split(qkv, 3, axis=-1)
    q = q.reshape(B, S, nhead, hd).transpose(0, 2, 1, 3) * scale
    k = k.reshape(B, S, nhead, hd).transpose(0, 2, 1, 3)
    v = v.reshape(B, S, nhead, hd).transpose(0, 2, 1, 3)
    s = jnp.einsum('bhqd,bhkd->bhqk', q.astype(bf16), k.astype(bf16),
                   preferred_element_type=f32)
    p = jax.nn.softmax(s, axis=-1)
    a = jnp.einsum('bhqk,bhkd->bhqd', p.astype(bf16), v.astype(bf16),
                   preferred_element_type=f32)
    a = a.transpose(0, 2, 1, 3).reshape(B, S, D)
    a = mm(a, params["wo"].T, params["bo"])
    x1 = ln(x + a, params["g1"], params["be1"])
    ff = mm(x1, params["w1"].T, params["b1"])
    ff = jnp.maximum(ff, 0.0)
    ff = mm(ff, params["w2"].T, params["b2"])
    out = ln(x1 + ff, params["g2"], params["be2"])
    return jnp.transpose(out, (1, 0, 2))                        # back to (S, B, D)


if __name__ == "__main__":
    # Small shapes consistent with the module: seq=8, batch=2, d_model=32,
    # nhead=4, dim_feedforward=64.
    S, B, D, NHEAD, FF = 8, 2, 32, 4, 64

    key = jax.random.PRNGKey(0)
    keys = jax.random.split(key, 9)
    params = {
        "wqkv": 0.1 * jax.random.normal(keys[0], (3 * D, D), jnp.float32),
        "bqkv": 0.1 * jax.random.normal(keys[1], (3 * D,), jnp.float32),
        "wo":   0.1 * jax.random.normal(keys[2], (D, D), jnp.float32),
        "bo":   0.1 * jax.random.normal(keys[3], (D,), jnp.float32),
        "w1":   0.1 * jax.random.normal(keys[4], (FF, D), jnp.float32),
        "b1":   0.1 * jax.random.normal(keys[5], (FF,), jnp.float32),
        "w2":   0.1 * jax.random.normal(keys[6], (D, FF), jnp.float32),
        "b2":   0.1 * jax.random.normal(keys[7], (D,), jnp.float32),
        "g1":   jnp.ones((D,), jnp.float32),
        "be1":  jnp.zeros((D,), jnp.float32),
        "g2":   jnp.ones((D,), jnp.float32),
        "be2":  jnp.zeros((D,), jnp.float32),
    }
    src = jax.random.normal(keys[8], (S, B, D), jnp.float32)

    fn = jax.jit(functools.partial(dev_transformer_encoder_layer, nhead=NHEAD))
    out = jax.block_until_ready(fn(src, params))

    ref = _reference(src, params, nhead=NHEAD)
    assert out.shape == (S, B, D)
    assert jnp.allclose(out, ref, atol=2e-2, rtol=2e-2), "mismatch vs reference"

    print("KERNEL_OK")
</pallas_src>

<mosaic_0001>
module attributes {stable_mosaic.version = 11 : i64} {
  func.func @_encoder_layer_kernel(%arg0: memref<16x32xf32, #tpu.memory_space<vmem>>, %arg1: memref<32x96xbf16, #tpu.memory_space<vmem>>, %arg2: memref<32x32xbf16, #tpu.memory_space<vmem>>, %arg3: memref<32x64xbf16, #tpu.memory_space<vmem>>, %arg4: memref<64x32xbf16, #tpu.memory_space<vmem>>, %arg5: memref<8x96xf32, #tpu.memory_space<vmem>>, %arg6: memref<16x32xf32, #tpu.memory_space<vmem>>) attributes {dimension_semantics = [], scalar_prefetch = 0 : i64, scratch_operands = 0 : i64, tpu.core_type = #tpu.core_type<tc>} {
    %c0 = arith.constant 0 : index
    %c0_0 = arith.constant 0 : index
    %0 = vector.load %arg5[%c0, %c0_0] : memref<8x96xf32, #tpu.memory_space<vmem>>, vector<8x96xf32>
    %1 = vector.extract_strided_slice %0 {offsets = [0, 0], sizes = [1, 96], strides = [1, 1]} : vector<8x96xf32> to vector<1x96xf32>
    %2 = vector.extract_strided_slice %0 {offsets = [1, 0], sizes = [1, 32], strides = [1, 1]} : vector<8x96xf32> to vector<1x32xf32>
    %3 = vector.extract_strided_slice %0 {offsets = [2, 0], sizes = [1, 64], strides = [1, 1]} : vector<8x96xf32> to vector<1x64xf32>
    %4 = vector.extract_strided_slice %0 {offsets = [3, 0], sizes = [1, 32], strides = [1, 1]} : vector<8x96xf32> to vector<1x32xf32>
    %5 = vector.extract_strided_slice %0 {offsets = [4, 0], sizes = [1, 32], strides = [1, 1]} : vector<8x96xf32> to vector<1x32xf32>
    %6 = vector.extract_strided_slice %0 {offsets = [5, 0], sizes = [1, 32], strides = [1, 1]} : vector<8x96xf32> to vector<1x32xf32>
    %7 = vector.extract_strided_slice %0 {offsets = [6, 0], sizes = [1, 32], strides = [1, 1]} : vector<8x96xf32> to vector<1x32xf32>
    %8 = vector.extract_strided_slice %0 {offsets = [7, 0], sizes = [1, 32], strides = [1, 1]} : vector<8x96xf32> to vector<1x32xf32>
    %c0_1 = arith.constant 0 : index
    %c0_2 = arith.constant 0 : index
    %9 = vector.load %arg0[%c0_1, %c0_2] : memref<16x32xf32, #tpu.memory_space<vmem>>, vector<16x32xf32>
    %cst = arith.constant dense<0.000000e+00> : vector<16xf32>
    %10 = vector.multi_reduction <add>, %9, %cst [1] : vector<16x32xf32> to vector<16xf32>
    %11 = vector.shape_cast %10 : vector<16xf32> to vector<16x1xf32>
    %cst_3 = arith.constant 3.200000e+01 : f32
    %12 = vector.broadcast %cst_3 : f32 to vector<16x1xf32>
    %13 = arith.divf %11, %12 : vector<16x1xf32>
    %14 = vector.broadcast %13 : vector<16x1xf32> to vector<16x32xf32>
    %15 = arith.subf %9, %14 : vector<16x32xf32>
    %16 = arith.mulf %15, %15 : vector<16x32xf32>
    %cst_4 = arith.constant dense<0.000000e+00> : vector<16xf32>
    %17 = vector.multi_reduction <add>, %16, %cst_4 [1] : vector<16x32xf32> to vector<16xf32>
    %18 = vector.shape_cast %17 : vector<16xf32> to vector<16x1xf32>
    %cst_5 = arith.constant 3.200000e+01 : f32
    %19 = vector.broadcast %cst_5 : f32 to vector<16x1xf32>
    %20 = arith.divf %18, %19 : vector<16x1xf32>
    %21 = vector.broadcast %13 : vector<16x1xf32> to vector<16x32xf32>
    %22 = arith.subf %9, %21 : vector<16x32xf32>
    %cst_6 = arith.constant 9.99999974E-6 : f32
    %23 = vector.broadcast %cst_6 : f32 to vector<16x1xf32>
    %24 = arith.addf %20, %23 : vector<16x1xf32>
    %25 = math.rsqrt %24 : vector<16x1xf32>
    %26 = vector.broadcast %25 : vector<16x1xf32> to vector<16x32xf32>
    %27 = arith.mulf %22, %26 : vector<16x32xf32>
    %28 = vector.broadcast %5 : vector<1x32xf32> to vector<16x32xf32>
    %29 = arith.mulf %27, %28 : vector<16x32xf32>
    %30 = vector.broadcast %6 : vector<1x32xf32> to vector<16x32xf32>
    %31 = arith.addf %29, %30 : vector<16x32xf32>
    %32 = arith.truncf %31 : vector<16x32xf32> to vector<16x32xbf16>
    %c0_7 = arith.constant 0 : index
    %c0_8 = arith.constant 0 : index
    %33 = vector.load %arg1[%c0_7, %c0_8] : memref<32x96xbf16, #tpu.memory_space<vmem>>, vector<32x96xbf16>
    %cst_9 = arith.constant dense<0.000000e+00> : vector<16x96xf32>
    %34 = tpu.matmul %32, %33, %cst_9 {dimension_numbers = #tpu.dot_dimension_numbers<[1], [0], [0], [1], [0, 0, 1, 1], [], []>} : vector<16x32xbf16>, vector<32x96xbf16>, vector<16x96xf32> -> vector<16x96xf32>
    %35 = vector.broadcast %1 : vector<1x96xf32> to vector<16x96xf32>
    %36 = arith.addf %34, %35 : vector<16x96xf32>
    %37 = vector.extract_strided_slice %36 {offsets = [0, 0], sizes = [16, 32], strides = [1, 1]} : vector<16x96xf32> to vector<16x32xf32>
    %38 = arith.truncf %37 : vector<16x32xf32> to vector<16x32xbf16>
    %39 = vector.extract_strided_slice %36 {offsets = [0, 32], sizes = [16, 32], strides = [1, 1]} : vector<16x96xf32> to vector<16x32xf32>
    %40 = arith.truncf %39 : vector<16x32xf32> to vector<16x32xbf16>
    %41 = vector.extract_strided_slice %36 {offsets = [0, 64], sizes = [16, 32], strides = [1, 1]} : vector<16x96xf32> to vector<16x32xf32>
    %42 = arith.truncf %41 : vector<16x32xf32> to vector<16x32xbf16>
    %43 = tpu.iota {dimensions = array<i32: 0>} : vector<16x16xi32>
    %44 = tpu.iota {dimensions = array<i32: 1>} : vector<16x16xi32>
    %c2_i32 = arith.constant 2 : i32
    %c0_i32 = arith.constant 0 : i32
    %45 = arith.cmpi eq, %c2_i32, %c0_i32 : i32
    %c1_i32 = arith.constant 1 : i32
    %46 = arith.select %45, %c1_i32, %c2_i32 : i32
    %47 = vector.broadcast %46 : i32 to vector<16x16xi32>
    %48 = arith.remsi %43, %47 : vector<16x16xi32>
    %c0_i32_10 = arith.constant 0 : i32
    %49 = vector.broadcast %c0_i32_10 : i32 to vector<16x16xi32>
    %50 = arith.cmpi ne, %48, %49 : vector<16x16xi32>
    %c0_i32_11 = arith.constant 0 : i32
    %51 = vector.broadcast %c0_i32_11 : i32 to vector<16x16xi32>
    %52 = arith.cmpi slt, %48, %51 : vector<16x16xi32>
    %c0_i32_12 = arith.constant 0 : i32
    %53 = arith.cmpi slt, %46, %c0_i32_12 : i32
    %54 = vector.broadcast %53 : i1 to vector<16x16xi1>
    %55 = vector.broadcast %54 : vector<16x16xi1> to vector<16x16xi1>
    %56 = arith.xori %52, %55 : vector<16x16xi1>
    %57 = arith.andi %56, %50 : vector<16x16xi1>
    %58 = vector.broadcast %46 : i32 to vector<16x16xi32>
    %59 = arith.addi %48, %58 : vector<16x16xi32>
    %60 = arith.select %57, %59, %48 : vector<16x16xi1>, vector<16x16xi32>
    %c2_i32_13 = arith.constant 2 : i32
    %c0_i32_14 = arith.constant 0 : i32
    %61 = arith.cmpi eq, %c2_i32_13, %c0_i32_14 : i32
    %c1_i32_15 = arith.constant 1 : i32
    %62 = arith.select %61, %c1_i32_15, %c2_i32_13 : i32
    %63 = vector.broadcast %62 : i32 to vector<16x16xi32>
    %64 = arith.remsi %44, %63 : vector<16x16xi32>
    %c0_i32_16 = arith.constant 0 : i32
    %65 = vector.broadcast %c0_i32_16 : i32 to vector<16x16xi32>
    %66 = arith.cmpi ne, %64, %65 : vector<16x16xi32>
    %c0_i32_17 = arith.constant 0 : i32
    %67 = vector.broadcast %c0_i32_17 : i32 to vector<16x16xi32>
    %68 = arith.cmpi slt, %64, %67 : vector<16x16xi32>
    %c0_i32_18 = arith.constant 0 : i32
    %69 = arith.cmpi slt, %62, %c0_i32_18 : i32
    %70 = vector.broadcast %69 : i1 to vector<16x16xi1>
    %71 = vector.broadcast %70 : vector<16x16xi1> to vector<16x16xi1>
    %72 = arith.xori %68, %71 : vector<16x16xi1>
    %73 = arith.andi %72, %66 : vector<16x16xi1>
    %74 = vector.broadcast %62 : i32 to vector<16x16xi32>
    %75 = arith.addi %64, %74 : vector<16x16xi32>
    %76 = arith.select %73, %75, %64 : vector<16x16xi1>, vector<16x16xi32>
    %77 = arith.cmpi eq, %60, %76 : vector<16x16xi32>
    %78 = vector.extract_strided_slice %38 {offsets = [0, 0], sizes = [16, 8], strides = [1, 1]} : vector<16x32xbf16> to vector<16x8xbf16>
    %79 = vector.extract_strided_slice %40 {offsets = [0, 0], sizes = [16, 8], strides = [1, 1]} : vector<16x32xbf16> to vector<16x8xbf16>
    %cst_19 = arith.constant dense<0.000000e+00> : vector<16x16xf32>
    %80 = tpu.matmul %78, %79, %cst_19 {dimension_numbers = #tpu.dot_dimension_numbers<[1], [1], [0], [0], [0, 0, 1, 0], [], []>} : vector<16x8xbf16>, vector<16x8xbf16>, vector<16x16xf32> -> vector<16x16xf32>
    %cst_20 = arith.constant -1.000000e+30 : f32
    %81 = vector.broadcast %cst_20 : f32 to vector<16x16xf32>
    %82 = arith.select %77, %80, %81 : vector<16x16xi1>, vector<16x16xf32>
    %cst_21 = arith.constant dense<0xFF800000> : vector<16xf32>
    %83 = vector.multi_reduction <maximumf>, %82, %cst_21 [1] : vector<16x16xf32> to vector<16xf32>
    %84 = vector.shape_cast %83 : vector<16xf32> to vector<16x1xf32>
    %85 = vector.broadcast %84 : vector<16x1xf32> to vector<16x16xf32>
    %86 = arith.subf %82, %85 : vector<16x16xf32>
    %87 = math.exp %86 : vector<16x16xf32>
    %cst_22 = arith.constant dense<0.000000e+00> : vector<16xf32>
    %88 = vector.multi_reduction <add>, %87, %cst_22 [1] : vector<16x16xf32> to vector<16xf32>
    %89 = vector.shape_cast %88 : vector<16xf32> to vector<16x1xf32>
    %90 = tpu.reciprocal %89 {approx = true} : vector<16x1xf32> -> vector<16x1xf32>
    %91 = vector.broadcast %90 : vector<16x1xf32> to vector<16x16xf32>
    %92 = arith.mulf %87, %91 : vector<16x16xf32>
    %93 = arith.truncf %92 : vector<16x16xf32> to vector<16x16xbf16>
    %94 = vector.extract_strided_slice %42 {offsets = [0, 0], sizes = [16, 8], strides = [1, 1]} : vector<16x32xbf16> to vector<16x8xbf16>
    %cst_23 = arith.constant dense<0.000000e+00> : vector<16x8xf32>
    %95 = tpu.matmul %93, %94, %cst_23 {dimension_numbers = #tpu.dot_dimension_numbers<[1], [0], [0], [1], [0, 0, 1, 1], [], []>} : vector<16x16xbf16>, vector<16x8xbf16>, vector<16x8xf32> -> vector<16x8xf32>
    %96 = arith.truncf %95 : vector<16x8xf32> to vector<16x8xbf16>
    %97 = vector.extract_strided_slice %38 {offsets = [0, 8], sizes = [16, 8], strides = [1, 1]} : vector<16x32xbf16> to vector<16x8xbf16>
    %98 = vector.extract_strided_slice %40 {offsets = [0, 8], sizes = [16, 8], strides = [1, 1]} : vector<16x32xbf16> to vector<16x8xbf16>
    %cst_24 = arith.constant dense<0.000000e+00> : vector<16x16xf32>
    %99 = tpu.matmul %97, %98, %cst_24 {dimension_numbers = #tpu.dot_dimension_numbers<[1], [1], [0], [0], [0, 0, 1, 0], [], []>} : vector<16x8xbf16>, vector<16x8xbf16>, vector<16x16xf32> -> vector<16x16xf32>
    %cst_25 = arith.constant -1.000000e+30 : f32
    %100 = vector.broadcast %cst_25 : f32 to vector<16x16xf32>
    %101 = arith.select %77, %99, %100 : vector<16x16xi1>, vector<16x16xf32>
    %cst_26 = arith.constant dense<0xFF800000> : vector<16xf32>
    %102 = vector.multi_reduction <maximumf>, %101, %cst_26 [1] : vector<16x16xf32> to vector<16xf32>
    %103 = vector.shape_cast %102 : vector<16xf32> to vector<16x1xf32>
    %104 = vector.broadcast %103 : vector<16x1xf32> to vector<16x16xf32>
    %105 = arith.subf %101, %104 : vector<16x16xf32>
    %106 = math.exp %105 : vector<16x16xf32>
    %cst_27 = arith.constant dense<0.000000e+00> : vector<16xf32>
    %107 = vector.multi_reduction <add>, %106, %cst_27 [1] : vector<16x16xf32> to vector<16xf32>
    %108 = vector.shape_cast %107 : vector<16xf32> to vector<16x1xf32>
    %109 = tpu.reciprocal %108 {approx = true} : vector<16x1xf32> -> vector<16x1xf32>
    %110 = vector.broadcast %109 : vector<16x1xf32> to vector<16x16xf32>
    %111 = arith.mulf %106, %110 : vector<16x16xf32>
    %112 = arith.truncf %111 : vector<16x16xf32> to vector<16x16xbf16>
    %113 = vector.extract_strided_slice %42 {offsets = [0, 8], sizes = [16, 8], strides = [1, 1]} : vector<16x32xbf16> to vector<16x8xbf16>
    %cst_28 = arith.constant dense<0.000000e+00> : vector<16x8xf32>
    %114 = tpu.matmul %112, %113, %cst_28 {dimension_numbers = #tpu.dot_dimension_numbers<[1], [0], [0], [1], [0, 0, 1, 1], [], []>} : vector<16x16xbf16>, vector<16x8xbf16>, vector<16x8xf32> -> vector<16x8xf32>
    %115 = arith.truncf %114 : vector<16x8xf32> to vector<16x8xbf16>
    %116 = vector.extract_strided_slice %38 {offsets = [0, 16], sizes = [16, 8], strides = [1, 1]} : vector<16x32xbf16> to vector<16x8xbf16>
    %117 = vector.extract_strided_slice %40 {offsets = [0, 16], sizes = [16, 8], strides = [1, 1]} : vector<16x32xbf16> to vector<16x8xbf16>
    %cst_29 = arith.constant dense<0.000000e+00> : vector<16x16xf32>
    %118 = tpu.matmul %116, %117, %cst_29 {dimension_numbers = #tpu.dot_dimension_numbers<[1], [1], [0], [0], [0, 0, 1, 0], [], []>} : vector<16x8xbf16>, vector<16x8xbf16>, vector<16x16xf32> -> vector<16x16xf32>
    %cst_30 = arith.constant -1.000000e+30 : f32
    %119 = vector.broadcast %cst_30 : f32 to vector<16x16xf32>
    %120 = arith.select %77, %118, %119 : vector<16x16xi1>, vector<16x16xf32>
    %cst_31 = arith.constant dense<0xFF800000> : vector<16xf32>
    %121 = vector.multi_reduction <maximumf>, %120, %cst_31 [1] : vector<16x16xf32> to vector<16xf32>
    %122 = vector.shape_cast %121 : vector<16xf32> to vector<16x1xf32>
    %123 = vector.broadcast %122 : vector<16x1xf32> to vector<16x16xf32>
    %124 = arith.subf %120, %123 : vector<16x16xf32>
    %125 = math.exp %124 : vector<16x16xf32>
    %cst_32 = arith.constant dense<0.000000e+00> : vector<16xf32>
    %126 = vector.multi_reduction <add>, %125, %cst_32 [1] : vector<16x16xf32> to vector<16xf32>
    %127 = vector.shape_cast %126 : vector<16xf32> to vector<16x1xf32>
    %128 = tpu.reciprocal %127 {approx = true} : vector<16x1xf32> -> vector<16x1xf32>
    %129 = vector.broadcast %128 : vector<16x1xf32> to vector<16x16xf32>
    %130 = arith.mulf %125, %129 : vector<16x16xf32>
    %131 = arith.truncf %130 : vector<16x16xf32> to vector<16x16xbf16>
    %132 = vector.extract_strided_slice %42 {offsets = [0, 16], sizes = [16, 8], strides = [1, 1]} : vector<16x32xbf16> to vector<16x8xbf16>
    %cst_33 = arith.constant dense<0.000000e+00> : vector<16x8xf32>
    %133 = tpu.matmul %131, %132, %cst_33 {dimension_numbers = #tpu.dot_dimension_numbers<[1], [0], [0], [1], [0, 0, 1, 1], [], []>} : vector<16x16xbf16>, vector<16x8xbf16>, vector<16x8xf32> -> vector<16x8xf32>
    %134 = arith.truncf %133 : vector<16x8xf32> to vector<16x8xbf16>
    %135 = vector.extract_strided_slice %38 {offsets = [0, 24], sizes = [16, 8], strides = [1, 1]} : vector<16x32xbf16> to vector<16x8xbf16>
    %136 = vector.extract_strided_slice %40 {offsets = [0, 24], sizes = [16, 8], strides = [1, 1]} : vector<16x32xbf16> to vector<16x8xbf16>
    %cst_34 = arith.constant dense<0.000000e+00> : vector<16x16xf32>
    %137 = tpu.matmul %135, %136, %cst_34 {dimension_numbers = #tpu.dot_dimension_numbers<[1], [1], [0], [0], [0, 0, 1, 0], [], []>} : vector<16x8xbf16>, vector<16x8xbf16>, vector<16x16xf32> -> vector<16x16xf32>
    %cst_35 = arith.constant -1.000000e+30 : f32
    %138 = vector.broadcast %cst_35 : f32 to vector<16x16xf32>
    %139 = arith.select %77, %137, %138 : vector<16x16xi1>, vector<16x16xf32>
    %cst_36 = arith.constant dense<0xFF800000> : vector<16xf32>
    %140 = vector.multi_reduction <maximumf>, %139, %cst_36 [1] : vector<16x16xf32> to vector<16xf32>
    %141 = vector.shape_cast %140 : vector<16xf32> to vector<16x1xf32>
    %142 = vector.broadcast %141 : vector<16x1xf32> to vector<16x16xf32>
    %143 = arith.subf %139, %142 : vector<16x16xf32>
    %144 = math.exp %143 : vector<16x16xf32>
    %cst_37 = arith.constant dense<0.000000e+00> : vector<16xf32>
    %145 = vector.multi_reduction <add>, %144, %cst_37 [1] : vector<16x16xf32> to vector<16xf32>
    %146 = vector.shape_cast %145 : vector<16xf32> to vector<16x1xf32>
    %147 = tpu.reciprocal %146 {approx = true} : vector<16x1xf32> -> vector<16x1xf32>
    %148 = vector.broadcast %147 : vector<16x1xf32> to vector<16x16xf32>
    %149 = arith.mulf %144, %148 : vector<16x16xf32>
    %150 = arith.truncf %149 : vector<16x16xf32> to vector<16x16xbf16>
    %151 = vector.extract_strided_slice %42 {offsets = [0, 24], sizes = [16, 8], strides = [1, 1]} : vector<16x32xbf16> to vector<16x8xbf16>
    %cst_38 = arith.constant dense<0.000000e+00> : vector<16x8xf32>
    %152 = tpu.matmul %150, %151, %cst_38 {dimension_numbers = #tpu.dot_dimension_numbers<[1], [0], [0], [1], [0, 0, 1, 1], [], []>} : vector<16x16xbf16>, vector<16x8xbf16>, vector<16x8xf32> -> vector<16x8xf32>
    %153 = arith.truncf %152 : vector<16x8xf32> to vector<16x8xbf16>
    %154 = tpu.concatenate %96, %115, %134, %153 in 1 : vector<16x8xbf16>, vector<16x8xbf16>, vector<16x8xbf16>, vector<16x8xbf16> -> vector<16x32xbf16>
    %c0_39 = arith.constant 0 : index
    %c0_40 = arith.constant 0 : index
    %155 = vector.load %arg2[%c0_39, %c0_40] : memref<32x32xbf16, #tpu.memory_space<vmem>>, vector<32x32xbf16>
    %cst_41 = arith.constant dense<0.000000e+00> : vector<16x32xf32>
    %156 = tpu.matmul %154, %155, %cst_41 {dimension_numbers = #tpu.dot_dimension_numbers<[1], [0], [0], [1], [0, 0, 1, 1], [], []>} : vector<16x32xbf16>, vector<32x32xbf16>, vector<16x32xf32> -> vector<16x32xf32>
    %157 = vector.broadcast %2 : vector<1x32xf32> to vector<16x32xf32>
    %158 = arith.addf %156, %157 : vector<16x32xf32>
    %159 = arith.addf %9, %158 : vector<16x32xf32>
    %cst_42 = arith.constant dense<0.000000e+00> : vector<16xf32>
    %160 = vector.multi_reduction <add>, %159, %cst_42 [1] : vector<16x32xf32> to vector<16xf32>
    %161 = vector.shape_cast %160 : vector<16xf32> to vector<16x1xf32>
    %cst_43 = arith.constant 3.200000e+01 : f32
    %162 = vector.broadcast %cst_43 : f32 to vector<16x1xf32>
    %163 = arith.divf %161, %162 : vector<16x1xf32>
    %164 = vector.broadcast %163 : vector<16x1xf32> to vector<16x32xf32>
    %165 = arith.subf %159, %164 : vector<16x32xf32>
    %166 = arith.mulf %165, %165 : vector<16x32xf32>
    %cst_44 = arith.constant dense<0.000000e+00> : vector<16xf32>
    %167 = vector.multi_reduction <add>, %166, %cst_44 [1] : vector<16x32xf32> to vector<16xf32>
    %168 = vector.shape_cast %167 : vector<16xf32> to vector<16x1xf32>
    %cst_45 = arith.constant 3.200000e+01 : f32
    %169 = vector.broadcast %cst_45 : f32 to vector<16x1xf32>
    %170 = arith.divf %168, %169 : vector<16x1xf32>
    %171 = vector.broadcast %163 : vector<16x1xf32> to vector<16x32xf32>
    %172 = arith.subf %159, %171 : vector<16x32xf32>
    %cst_46 = arith.constant 9.99999974E-6 : f32
    %173 = vector.broadcast %cst_46 : f32 to vector<16x1xf32>
    %174 = arith.addf %170, %173 : vector<16x1xf32>
    %175 = math.rsqrt %174 : vector<16x1xf32>
    %176 = vector.broadcast %175 : vector<16x1xf32> to vector<16x32xf32>
    %177 = arith.mulf %172, %176 : vector<16x32xf32>
    %178 = vector.broadcast %5 : vector<1x32xf32> to vector<16x32xf32>
    %179 = arith.mulf %177, %178 : vector<16x32xf32>
    %180 = vector.broadcast %6 : vector<1x32xf32> to vector<16x32xf32>
    %181 = arith.addf %179, %180 : vector<16x32xf32>
    %182 = arith.truncf %181 : vector<16x32xf32> to vector<16x32xbf16>
    %c0_47 = arith.constant 0 : index
    %c0_48 = arith.constant 0 : index
    %183 = vector.load %arg3[%c0_47, %c0_48] : memref<32x64xbf16, #tpu.memory_space<vmem>>, vector<32x64xbf16>
    %cst_49 = arith.constant dense<0.000000e+00> : vector<16x64xf32>
    %184 = tpu.matmul %182, %183, %cst_49 {dimension_numbers = #tpu.dot_dimension_numbers<[1], [0], [0], [1], [0, 0, 1, 1], [], []>} : vector<16x32xbf16>, vector<32x64xbf16>, vector<16x64xf32> -> vector<16x64xf32>
    %185 = vector.broadcast %3 : vector<1x64xf32> to vector<16x64xf32>
    %186 = arith.addf %184, %185 : vector<16x64xf32>
    %cst_50 = arith.constant 0.000000e+00 : f32
    %187 = vector.broadcast %cst_50 : f32 to vector<16x64xf32>
    %188 = arith.maximumf %186, %187 : vector<16x64xf32>
    %189 = arith.truncf %188 : vector<16x64xf32> to vector<16x64xbf16>
    %c0_51 = arith.constant 0 : index
    %c0_52 = arith.constant 0 : index
    %190 = vector.load %arg4[%c0_51, %c0_52] : memref<64x32xbf16, #tpu.memory_space<vmem>>, vector<64x32xbf16>
    %cst_53 = arith.constant dense<0.000000e+00> : vector<16x32xf32>
    %191 = tpu.matmul %189, %190, %cst_53 {dimension_numbers = #tpu.dot_dimension_numbers<[1], [0], [0], [1], [0, 0, 1, 1], [], []>} : vector<16x64xbf16>, vector<64x32xbf16>, vector<16x32xf32> -> vector<16x32xf32>
    %192 = vector.broadcast %4 : vector<1x32xf32> to vector<16x32xf32>
    %193 = arith.addf %191, %192 : vector<16x32xf32>
    %194 = arith.addf %181, %193 : vector<16x32xf32>
    %cst_54 = arith.constant dense<0.000000e+00> : vector<16xf32>
    %195 = vector.multi_reduction <add>, %194, %cst_54 [1] : vector<16x32xf32> to vector<16xf32>
    %196 = vector.shape_cast %195 : vector<16xf32> to vector<16x1xf32>
    %cst_55 = arith.constant 3.200000e+01 : f32
    %197 = vector.broadcast %cst_55 : f32 to vector<16x1xf32>
    %198 = arith.divf %196, %197 : vector<16x1xf32>
    %199 = vector.broadcast %198 : vector<16x1xf32> to vector<16x32xf32>
    %200 = arith.subf %194, %199 : vector<16x32xf32>
    %201 = arith.mulf %200, %200 : vector<16x32xf32>
    %cst_56 = arith.constant dense<0.000000e+00> : vector<16xf32>
    %202 = vector.multi_reduction <add>, %201, %cst_56 [1] : vector<16x32xf32> to vector<16xf32>
    %203 = vector.shape_cast %202 : vector<16xf32> to vector<16x1xf32>
    %cst_57 = arith.constant 3.200000e+01 : f32
    %204 = vector.broadcast %cst_57 : f32 to vector<16x1xf32>
    %205 = arith.divf %203, %204 : vector<16x1xf32>
    %206 = vector.broadcast %198 : vector<16x1xf32> to vector<16x32xf32>
    %207 = arith.subf %194, %206 : vector<16x32xf32>
    %cst_58 = arith.constant 9.99999974E-6 : f32
    %208 = vector.broadcast %cst_58 : f32 to vector<16x1xf32>
    %209 = arith.addf %205, %208 : vector<16x1xf32>
    %210 = math.rsqrt %209 : vector<16x1xf32>
    %211 = vector.broadcast %210 : vector<16x1xf32> to vector<16x32xf32>
    %212 = arith.mulf %207, %211 : vector<16x32xf32>
    %213 = vector.broadcast %7 : vector<1x32xf32> to vector<16x32xf32>
    %214 = arith.mulf %212, %213 : vector<16x32xf32>
    %215 = vector.broadcast %8 : vector<1x32xf32> to vector<16x32xf32>
    %216 = arith.addf %214, %215 : vector<16x32xf32>
    %c0_59 = arith.constant 0 : index
    %c0_60 = arith.constant 0 : index
    %217 = vector.load %arg6[%c0_59, %c0_60] : memref<16x32xf32, #tpu.memory_space<vmem>>, vector<16x32xf32>
    tpu.vector_store %arg6[%c0_59, %c0_60], %216 {strides = array<i32>} : memref<16x32xf32, #tpu.memory_space<vmem>>, vector<16x32xf32>,
    return
  }
}

</mosaic_0001>

<llo_original>
// kernel: dev_transformer_encoder_layer.1
$region0: #{dev_transformer_encoder_layer.1}
  #allocation0 [shape = 'u32[]', space=smem, size = 0x4, offset = 0x4, fixed_abs, tag = 'smem constant byte address 0x4 - core index']
  #allocation1 [shape = 'u32[72,128]{1,0:T(1,128)}', space=vmem, size = 0x9000, scoped, tag = 'internal scratch']
  %s0 = inlined_call_operand.vmem [shape: f32[16,32], index: 0, kind: input, shape index: {}]
  %s1 = inlined_call_operand.vmem [shape: bf16[32,96], index: 1, kind: input, shape index: {}]
  %s2 = inlined_call_operand.vmem [shape: bf16[32,32], index: 2, kind: input, shape index: {}]
  %s3 = inlined_call_operand.vmem [shape: bf16[32,64], index: 3, kind: input, shape index: {}]
  %s4 = inlined_call_operand.vmem [shape: bf16[64,32], index: 4, kind: input, shape index: {}]
  %s5 = inlined_call_operand.vmem [shape: f32[8,96], index: 5, kind: input, shape index: {}]
  %s6 = inlined_call_operand.hbm [shape: f32[16,32], index: 6, kind: output, shape index: {}]
  %s7 = sld [smem:[#allocation0]]
  $region34: #{dev_transformer_encoder_layer.1} parent=0
    _
  %s9 = ssub.s32 1, %s7
  %s10 = scalar_select 0, %s9, %s7
  $region1: #{dev_transformer_encoder_layer.1} parent=0
    #allocation2 [shape = 'u8[8192]{0}', space=vmem, size = 0x2000, scoped, tag = 'output window, operand 0, single buffered']
    #allocation3 [shape = 's32[1]{0}', space=sflag, size = 0x4, scoped, tag = 'scoped memory for dev_transformer_encoder_layer.1']
    %11 = vsyncpa [#allocation3], 0
    // Predicated region
    $region2: #{dev_transformer_encoder_layer.1} parent=1 // pred_check
      _
    $region3: #{dev_transformer_encoder_layer.1} parent=1 // pred_check_branch
      %13 = sbr.rel (0) target = $region5
    $region4: #{dev_transformer_encoder_layer.1} parent=1 // pred_region
      _
    $region5: #{dev_transformer_encoder_layer.1} parent=1 // pred_fallthru
      _
    // Predicated region
    $region6: #{dev_transformer_encoder_layer.1} parent=1 // pred_check
      _
    $region7: #{dev_transformer_encoder_layer.1} parent=1 // pred_check_branch
      %15 = sbr.rel (0) target = $region9
    $region8: #{dev_transformer_encoder_layer.1} parent=1 // pred_region
      _
    $region9: #{dev_transformer_encoder_layer.1} parent=1 // pred_fallthru
      _
    // Predicated region
    $region10: #{dev_transformer_encoder_layer.1} parent=1 // pred_check
      _
    $region11: #{dev_transformer_encoder_layer.1} parent=1 // pred_check_branch
      %17 = sbr.rel (0) target = $region13
    $region12: #{dev_transformer_encoder_layer.1} parent=1 // pred_region
      _
    $region13: #{dev_transformer_encoder_layer.1} parent=1 // pred_fallthru
      _
    // Predicated region
    $region14: #{dev_transformer_encoder_layer.1} parent=1 // pred_check
      _
    $region15: #{dev_transformer_encoder_layer.1} parent=1 // pred_check_branch
      %19 = sbr.rel (0) target = $region17
    $region16: #{dev_transformer_encoder_layer.1} parent=1 // pred_region
      _
    $region17: #{dev_transformer_encoder_layer.1} parent=1 // pred_fallthru
      _
    // Predicated region
    $region18: #{dev_transformer_encoder_layer.1} parent=1 // pred_check
      _
    $region19: #{dev_transformer_encoder_layer.1} parent=1 // pred_check_branch
      %21 = sbr.rel (0) target = $region21
    $region20: #{dev_transformer_encoder_layer.1} parent=1 // pred_region
      _
    $region21: #{dev_transformer_encoder_layer.1} parent=1 // pred_fallthru
      _
    // Predicated region
    $region22: #{dev_transformer_encoder_layer.1} parent=1 // pred_check
      _
    $region23: #{dev_transformer_encoder_layer.1} parent=1 // pred_check_branch
      %23 = sbr.rel (0) target = $region25
    $region24: #{dev_transformer_encoder_layer.1} parent=1 // pred_region
      _
    $region25: #{dev_transformer_encoder_layer.1} parent=1 // pred_fallthru
      _
    %v25 = vld [vmem:[%s5] sm:$0xff]
    %v26 = vld [vmem:[%s0] sm:$0xff]
    %v27 = vld [vmem:[%s0 + $0x8] sm:$0xff]
    %vm28 = vcmask 261120
    %v29 = vsel %vm28, %v26, 0.0
    %30 = vadd.xlane.f32.xlu0 %v29
    %v31 = vpop.xlane.xlu0 %30
    %v32 = vsel %vm28, %v27, 0.0
    %33 = vadd.xlane.f32.xlu0 %v32
    %v34 = vpop.xlane.xlu0 %33
    %v35 = vrcp.pop 32.0
    %v36 = vmul.f32 32.0, %v35
    %v37 = vsub.f32 1.0, %v36
    %v38 = vmul.f32 %v35, %v37
    %v39 = vadd.f32 %v35, %v38
    %vm40 = vweird.f32 %v35
    %v41 = vsel %vm40, %v35, %v39
    %v42 = vmul.f32 %v31, %v41
    %v43 = vmul.f32 %v34, %v41
    %v44 = vsub.f32 %v26, %v42
    %v45 = vsub.f32 %v27, %v43
    %v46 = vmul.f32 %v44, %v44
    %v47 = vmul.f32 %v45, %v45
    %v48 = vsel %vm28, %v46, 0.0
    %49 = vadd.xlane.f32.xlu0 %v48
    %v50 = vpop.xlane.xlu0 %49
    %v51 = vsel %vm28, %v47, 0.0
    %52 = vadd.xlane.f32.xlu0 %v51
    %v53 = vpop.xlane.xlu0 %52
    %v54 = vmul.f32 %v50, %v41
    %v55 = vmul.f32 %v53, %v41
    %v56 = vadd.f32 %v54, 1e-05
    %v57 = vadd.f32 %v55, 1e-05
    %v58 = vrsqrt.pop %v56
    %v59 = vmul.f32 %v58, %v56
    %v60 = vmul.f32 %v59, %v58
    %v61 = vmul.f32 0.5, %v60
    %v62 = vsub.f32 1.5, %v61
    %v63 = vmul.f32 %v58, %v62
    %vm64 = vweird.f32 %v56
    %vm65 = vweird.f32 %v58
    %vm66 = vmor %vm64, %vm65
    %v67 = vsel %vm66, %v58, %v63
    %v68 = vrsqrt.pop %v57
    %v69 = vmul.f32 %v68, %v57
    %v70 = vmul.f32 %v69, %v68
    %v71 = vmul.f32 0.5, %v70
    %v72 = vsub.f32 1.5, %v71
    %v73 = vmul.f32 %v68, %v72
    %vm74 = vweird.f32 %v57
    %vm75 = vweird.f32 %v68
    %vm76 = vmor %vm74, %vm75
    %v77 = vsel %vm76, %v68, %v73
    %v78 = vmul.f32 %v44, %v67
    %v79 = vmul.f32 %v45, %v77
    %v80 = vperm.slane %v25, 4
    %v81 = vmul.f32 %v78, %v80
    %v82 = vmul.f32 %v79, %v80
    %v83 = vperm.slane %v25, 5
    %v84 = vadd.f32 %v81, %v83
    %v85 = vadd.f32 %v82, %v83
    %v86 = vpack.c.bf16 %v85, %v84
    %v87 = vld [vmem:[%s1] sm:$0xf]
    %v88 = vld [vmem:[%s1 + $0x4] sm:$0xf]
    %v89 = vld [vmem:[%s1 + $0x8] sm:$0xf]
    %v90 = vld [vmem:[%s1 + $0xc] sm:$0xf]
    %v91 = vperm.slane %v25, 0
    %v96 = vunpack.c.l.b16 %v87
    %v97 = vunpack.c.l.b16 %v88
    %v98 = vunpack.c.l.b16 %v89
    %v99 = vunpack.c.l.b16 %v90
    %v100 = vpack.c.b16 %v97, %v96
    %v101 = vpack.c.b16 %v99, %v98
    %v105 = vsel %vm28, %v86, 0
    %107 = vmatpush.bf16.msra.mxu0 0
    %108 = vmatpush.bf16.msra.mxu0 0
    %109 = vmatpush.bf16.msra.mxu0 0
    %110 = vmatpush.bf16.msra.mxu0 0
    %111 = vmatpush.bf16.msra.mxu0 0
    %112 = vmatpush.bf16.msra.mxu0 0
    %113 = vmatpush.bf16.msra.mxu0 %v101
    %114 = vmatpush.bf16.msra.mxu0 %v100
    %115 = vmatmul.bf16.gmra.mxu0 %v105
    %v116 = vpop.f32.mrf.mxu0
    %v117 = vadd.f32 %v91, %v116
    %v118 = vpop.f32.mrf.mxu0
    %v119 = vadd.f32 %v91, %v118
    %120 = vdwg.mxu0
    %v121 = vpack.c.bf16 %v117, %v117
    %v122 = vpack.c.bf16 %v119, %v119
    %v123 = vlaneseq
    %v124 = vshrl.u32 %v123, 7
    %v125 = vadd.s32 %v124, 8
    %v126 = vlaneseq
    %v127 = vand.u32 %v126, 127
    %vm128 = vcmp.lt.s32.totalorder %v124, 0
    %v129 = vsub.s32 0, %v124
    %v130 = vsel %vm128, %v129, %v124
    %v131 = vshrl.u32 %v130, 1
    %v132 = vand.u32 %v130, 1
    %v133 = vsub.s32 0, %v132
    %v134 = vsel %vm128, %v133, %v132
    %vm135 = vcmp.lt.s32.totalorder %v125, 0
    %v136 = vsub.s32 0, %v125
    %v137 = vsel %vm135, %v136, %v125
    %v138 = vshrl.u32 %v137, 1
    %v139 = vand.u32 %v137, 1
    %v140 = vsub.s32 0, %v139
    %v141 = vsel %vm135, %v140, %v139
    %vm142 = vcmp.ne.s32.totalorder %v134, 0
    %vm143 = vcmp.ne.s32.totalorder %v141, 0
    %vm144 = vcmp.lt.s32.totalorder %v134, 0
    %vm145 = vcmp.lt.s32.totalorder %v141, 0
    %vm146 = vmand %vm144, %vm142
    %vm147 = vmand %vm145, %vm143
    %v148 = vadd.s32 %v134, 2
    %v149 = vadd.s32 %v141, 2
    %v150 = vsel %vm146, %v148, %v134
    %v151 = vsel %vm147, %v149, %v141
    %vm152 = vcmp.lt.s32.totalorder %v127, 0
    %v153 = vsub.s32 0, %v127
    %v154 = vsel %vm152, %v153, %v127
    %v155 = vshrl.u32 %v154, 1
    %v156 = vand.u32 %v154, 1
    %v157 = vsub.s32 0, %v156
    %v158 = vsel %vm152, %v157, %v156
    %vm159 = vcmp.ne.s32.totalorder %v158, 0
    %vm160 = vcmp.lt.s32.totalorder %v158, 0
    %vm161 = vmand %vm160, %vm159
    %v162 = vadd.s32 %v158, 2
    %v163 = vsel %vm161, %v162, %v158
    %vm164 = vcmp.eq.s32.totalorder %v150, %v163
    %vm165 = vcmp.eq.s32.totalorder %v151, %v163
    %v168 = vunpack.c.l.b16 %v121
    %v169 = vunpack.c.l.b16 %v122
    %v170 = vpack.c.b16 %v169, %v168
    %171 = vrot.lane.b32.xlu0 %v170, 96
    %v172 = vpop.permute.xlu0 %171
    %vm173 = vcmask 64512
    %v175 = vsel %vm173, %v170, 0
    %v178 = vsel %vm173, %v172, 0
    %180 = vmatpush.bf16.xpose.msra.mxu0 0
    %181 = vmatpush.bf16.xpose.msra.mxu0 0
    %182 = vmatpush.bf16.xpose.msra.mxu0 0
    %183 = vmatpush.bf16.xpose.msra.mxu0 0
    %184 = vmatpush.bf16.xpose.msra.mxu0 0
    %185 = vmatpush.bf16.xpose.msra.mxu0 0
    %186 = vmatpush.bf16.xpose.msra.mxu0 0
    %187 = vmatpush.bf16.xpose.msra.mxu0 %v178
    %188 = vmatmul.bf16.gmra.mxu0 %v175
    %v189 = vpop.f32.mrf.mxu0
    %v190 = vadd.f32 0.0, %v189
    %v191 = vpop.f32.mrf.mxu0
    %v192 = vadd.f32 0.0, %v191
    %193 = vdwg.mxu0
    %v194 = vsel %vm164, %v190, -1e+30
    %v195 = vsel %vm165, %v192, -1e+30
    %vm196 = vcmask 130048
    %v197 = vsel %vm196, %v194, -inf
    %198 = vmax.xlane.f32.xlu0 %v197
    %v199 = vpop.xlane.xlu0 %198
    %v200 = vsel %vm196, %v195, -inf
    %201 = vmax.xlane.f32.xlu0 %v200
    %v202 = vpop.xlane.xlu0 %201
    %v203 = vsub.f32 %v194, %v199
    %v204 = vsub.f32 %v195, %v202
    %v205 = vmul.f32 %v203, 1.442695
    %v206 = vpow.pop %v205
    %v207 = vmul.f32 %v204, 1.442695
    %v208 = vpow.pop %v207
    %v209 = vsel %vm196, %v206, 0.0
    %210 = vadd.xlane.f32.xlu0 %v209
    %v211 = vpop.xlane.xlu0 %210
    %v212 = vsel %vm196, %v208, 0.0
    %213 = vadd.xlane.f32.xlu0 %v212
    %v214 = vpop.xlane.xlu0 %213
    %v215 = vrcp.pop %v211
    %v216 = vrcp.pop %v214
    %v217 = vmul.f32 %v206, %v215
    %v218 = vmul.f32 %v208, %v216
    %v219 = vpack.c.bf16 %v218, %v217
    %220 = vrot.lane.b32.xlu0 %v170, 64
    %v221 = vpop.permute.xlu0 %220
    %v224 = vsel %vm196, %v219, 0
    %226 = vmatpush.bf16.msra.mxu0 0
    %227 = vmatpush.bf16.msra.mxu0 0
    %228 = vmatpush.bf16.msra.mxu0 0
    %229 = vmatpush.bf16.msra.mxu0 0
    %230 = vmatpush.bf16.msra.mxu0 0
    %231 = vmatpush.bf16.msra.mxu0 0
    %232 = vmatpush.bf16.msra.mxu0 0
    %233 = vmatpush.bf16.msra.mxu0 %v221
    %234 = vmatmul.bf16.gmra.mxu0 %v224
    %v235 = vpop.f32.mrf.mxu0
    %v236 = vadd.f32 0.0, %v235
    %v237 = vpop.f32.mrf.mxu0
    %v238 = vadd.f32 0.0, %v237
    %239 = vdwg.mxu0
    %v240 = vpack.c.bf16 %v236, %v236
    %v241 = vpack.c.bf16 %v238, %v238
    %242 = vrot.lane.b32.xlu0 %v170, 120
    %v243 = vpop.permute.xlu0 %242
    %244 = vrot.lane.b32.xlu0 %v170, 88
    %v245 = vpop.permute.xlu0 %244
    %v247 = vsel %vm173, %v243, 0
    %v250 = vsel %vm173, %v245, 0
    %252 = vmatpush.bf16.xpose.msra.mxu0 0
    %253 = vmatpush.bf16.xpose.msra.mxu0 0
    %254 = vmatpush.bf16.xpose.msra.mxu0 0
    %255 = vmatpush.bf16.xpose.msra.mxu0 0
    %256 = vmatpush.bf16.xpose.msra.mxu0 0
    %257 = vmatpush.bf16.xpose.msra.mxu0 0
    %258 = vmatpush.bf16.xpose.msra.mxu0 0
    %259 = vmatpush.bf16.xpose.msra.mxu0 %v250
    %260 = vmatmul.bf16.gmra.mxu0 %v247
    %v261 = vpop.f32.mrf.mxu0
    %v262 = vadd.f32 0.0, %v261
    %v263 = vpop.f32.mrf.mxu0
    %v264 = vadd.f32 0.0, %v263
    %265 = vdwg.mxu0
    %v266 = vsel %vm164, %v262, -1e+30
    %v267 = vsel %vm165, %v264, -1e+30
    %v268 = vsel %vm196, %v266, -inf
    %269 = vmax.xlane.f32.xlu0 %v268
    %v270 = vpop.xlane.xlu0 %269
    %v271 = vsel %vm196, %v267, -inf
    %272 = vmax.xlane.f32.xlu0 %v271
    %v273 = vpop.xlane.xlu0 %272
    %v274 = vsub.f32 %v266, %v270
    %v275 = vsub.f32 %v267, %v273
    %v276 = vmul.f32 %v274, 1.442695
    %v277 = vpow.pop %v276
    %v278 = vmul.f32 %v275, 1.442695
    %v279 = vpow.pop %v278
    %v280 = vsel %vm196, %v277, 0.0
    %281 = vadd.xlane.f32.xlu0 %v280
    %v282 = vpop.xlane.xlu0 %281
    %v283 = vsel %vm196, %v279, 0.0
    %284 = vadd.xlane.f32.xlu0 %v283
    %v285 = vpop.xlane.xlu0 %284
    %v286 = vrcp.pop %v282
    %v287 = vrcp.pop %v285
    %v288 = vmul.f32 %v277, %v286
    %v289 = vmul.f32 %v279, %v287
    %v290 = vpack.c.bf16 %v289, %v288
    %291 = vrot.lane.b32.xlu0 %v170, 56
    %v292 = vpop.permute.xlu0 %291
    %v295 = vsel %vm196, %v290, 0
    %297 = vmatpush.bf16.msra.mxu0 0
    %298 = vmatpush.bf16.msra.mxu0 0
    %299 = vmatpush.bf16.msra.mxu0 0
    %300 = vmatpush.bf16.msra.mxu0 0
    %301 = vmatpush.bf16.msra.mxu0 0
    %302 = vmatpush.bf16.msra.mxu0 0
    %303 = vmatpush.bf16.msra.mxu0 0
    %304 = vmatpush.bf16.msra.mxu0 %v292
    %305 = vmatmul.bf16.gmra.mxu0 %v295
    %v306 = vpop.f32.mrf.mxu0
    %v307 = vadd.f32 0.0, %v306
    %v308 = vpop.f32.mrf.mxu0
    %v309 = vadd.f32 0.0, %v308
    %310 = vdwg.mxu0
    %v311 = vpack.c.bf16 %v307, %v307
    %v312 = vpack.c.bf16 %v309, %v309
    %313 = vrot.lane.b32.xlu0 %v170, 112
    %v314 = vpop.permute.xlu0 %313
    %315 = vrot.lane.b32.xlu0 %v170, 80
    %v316 = vpop.permute.xlu0 %315
    %v318 = vsel %vm173, %v314, 0
    %v321 = vsel %vm173, %v316, 0
    %323 = vmatpush.bf16.xpose.msra.mxu0 0
    %324 = vmatpush.bf16.xpose.msra.mxu0 0
    %325 = vmatpush.bf16.xpose.msra.mxu0 0
    %326 = vmatpush.bf16.xpose.msra.mxu0 0
    %327 = vmatpush.bf16.xpose.msra.mxu0 0
    %328 = vmatpush.bf16.xpose.msra.mxu0 0
    %329 = vmatpush.bf16.xpose.msra.mxu0 0
    %330 = vmatpush.bf16.xpose.msra.mxu0 %v321
    %331 = vmatmul.bf16.gmra.mxu0 %v318
    %v332 = vpop.f32.mrf.mxu0
    %v333 = vadd.f32 0.0, %v332
    %v334 = vpop.f32.mrf.mxu0
    %v335 = vadd.f32 0.0, %v334
    %336 = vdwg.mxu0
    %v337 = vsel %vm164, %v333, -1e+30
    %v338 = vsel %vm165, %v335, -1e+30
    %v339 = vsel %vm196, %v337, -inf
    %340 = vmax.xlane.f32.xlu0 %v339
    %v341 = vpop.xlane.xlu0 %340
    %v342 = vsel %vm196, %v338, -inf
    %343 = vmax.xlane.f32.xlu0 %v342
    %v344 = vpop.xlane.xlu0 %343
    %v345 = vsub.f32 %v337, %v341
    %v346 = vsub.f32 %v338, %v344
    %v347 = vmul.f32 %v345, 1.442695
    %v348 = vpow.pop %v347
    %v349 = vmul.f32 %v346, 1.442695
    %v350 = vpow.pop %v349
    %v351 = vsel %vm196, %v348, 0.0
    %352 = vadd.xlane.f32.xlu0 %v351
    %v353 = vpop.xlane.xlu0 %352
    %v354 = vsel %vm196, %v350, 0.0
    %355 = vadd.xlane.f32.xlu0 %v354
    %v356 = vpop.xlane.xlu0 %355
    %v357 = vrcp.pop %v353
    %v358 = vrcp.pop %v356
    %v359 = vmul.f32 %v348, %v357
    %v360 = vmul.f32 %v350, %v358
    %v361 = vpack.c.bf16 %v360, %v359
    %362 = vrot.lane.b32.xlu0 %v170, 48
    %v363 = vpop.permute.xlu0 %362
    %v366 = vsel %vm196, %v361, 0
    %368 = vmatpush.bf16.msra.mxu0 0
    %369 = vmatpush.bf16.msra.mxu0 0
    %370 = vmatpush.bf16.msra.mxu0 0
    %371 = vmatpush.bf16.msra.mxu0 0
    %372 = vmatpush.bf16.msra.mxu0 0
    %373 = vmatpush.bf16.msra.mxu0 0
    %374 = vmatpush.bf16.msra.mxu0 0
    %375 = vmatpush.bf16.msra.mxu0 %v363
    %376 = vmatmul.bf16.gmra.mxu0 %v366
    %v377 = vpop.f32.mrf.mxu0
    %v378 = vadd.f32 0.0, %v377
    %v379 = vpop.f32.mrf.mxu0
    %v380 = vadd.f32 0.0, %v379
    %381 = vdwg.mxu0
    %v382 = vpack.c.bf16 %v378, %v378
    %v383 = vpack.c.bf16 %v380, %v380
    %384 = vrot.lane.b32.xlu0 %v170, 104
    %v385 = vpop.permute.xlu0 %384
    %386 = vrot.lane.b32.xlu0 %v170, 72
    %v387 = vpop.permute.xlu0 %386
    %v389 = vsel %vm173, %v385, 0
    %v392 = vsel %vm173, %v387, 0
    %394 = vmatpush.bf16.xpose.msra.mxu0 0
    %395 = vmatpush.bf16.xpose.msra.mxu0 0
    %396 = vmatpush.bf16.xpose.msra.mxu0 0
    %397 = vmatpush.bf16.xpose.msra.mxu0 0
    %398 = vmatpush.bf16.xpose.msra.mxu0 0
    %399 = vmatpush.bf16.xpose.msra.mxu0 0
    %400 = vmatpush.bf16.xpose.msra.mxu0 0
    %401 = vmatpush.bf16.xpose.msra.mxu0 %v392
    %402 = vmatmul.bf16.gmra.mxu0 %v389
    %v403 = vpop.f32.mrf.mxu0
    %v404 = vadd.f32 0.0, %v403
    %v405 = vpop.f32.mrf.mxu0
    %v406 = vadd.f32 0.0, %v405
    %407 = vdwg.mxu0
    %v408 = vsel %vm164, %v404, -1e+30
    %v409 = vsel %vm165, %v406, -1e+30
    %v410 = vsel %vm196, %v408, -inf
    %411 = vmax.xlane.f32.xlu0 %v410
    %v412 = vpop.xlane.xlu0 %411
    %v413 = vsel %vm196, %v409, -inf
    %414 = vmax.xlane.f32.xlu0 %v413
    %v415 = vpop.xlane.xlu0 %414
    %v416 = vsub.f32 %v408, %v412
    %v417 = vsub.f32 %v409, %v415
    %v418 = vmul.f32 %v416, 1.442695
    %v419 = vpow.pop %v418
    %v420 = vmul.f32 %v417, 1.442695
    %v421 = vpow.pop %v420
    %v422 = vsel %vm196, %v419, 0.0
    %423 = vadd.xlane.f32.xlu0 %v422
    %v424 = vpop.xlane.xlu0 %423
    %v425 = vsel %vm196, %v421, 0.0
    %426 = vadd.xlane.f32.xlu0 %v425
    %v427 = vpop.xlane.xlu0 %426
    %v428 = vrcp.pop %v424
    %v429 = vrcp.pop %v427
    %v430 = vmul.f32 %v419, %v428
    %v431 = vmul.f32 %v421, %v429
    %v432 = vpack.c.bf16 %v431, %v430
    %433 = vrot.lane.b32.xlu0 %v170, 40
    %v434 = vpop.permute.xlu0 %433
    %v437 = vsel %vm196, %v432, 0
    %439 = vmatpush.bf16.msra.mxu0 0
    %440 = vmatpush.bf16.msra.mxu0 0
    %441 = vmatpush.bf16.msra.mxu0 0
    %442 = vmatpush.bf16.msra.mxu0 0
    %443 = vmatpush.bf16.msra.mxu0 0
    %444 = vmatpush.bf16.msra.mxu0 0
    %445 = vmatpush.bf16.msra.mxu0 0
    %446 = vmatpush.bf16.msra.mxu0 %v434
    %447 = vmatmul.bf16.gmra.mxu0 %v437
    %v448 = vpop.f32.mrf.mxu0
    %v449 = vadd.f32 0.0, %v448
    %v450 = vpop.f32.mrf.mxu0
    %v451 = vadd.f32 0.0, %v450
    %452 = vdwg.mxu0
    %v453 = vpack.c.bf16 %v449, %v449
    %v454 = vpack.c.bf16 %v451, %v451
    %v457 = vunpack.c.l.b16 %v240
    %v458 = vunpack.c.l.b16 %v241
    %v459 = vpack.c.b16 %v458, %v457
    %v462 = vunpack.c.l.b16 %v311
    %v463 = vunpack.c.l.b16 %v312
    %v464 = vpack.c.b16 %v463, %v462
    %465 = vrot.lane.b32.xlu0 %v464, 8
    %v466 = vpop.permute.xlu0 %465
    %v469 = vunpack.c.l.b16 %v382
    %v470 = vunpack.c.l.b16 %v383
    %v471 = vpack.c.b16 %v470, %v469
    %472 = vrot.lane.b32.xlu0 %v471, 16
    %v473 = vpop.permute.xlu0 %472
    %v476 = vunpack.c.l.b16 %v453
    %v477 = vunpack.c.l.b16 %v454
    %v478 = vpack.c.b16 %v477, %v476
    %479 = vrot.lane.b32.xlu0 %v478, 24
    %v480 = vpop.permute.xlu0 %479
    %v483 = vsel %vm173, %v459, %v466
    %v485 = vsel %vm196, %v483, %v473
    %vm486 = vcmask 195584
    %v488 = vsel %vm486, %v485, %v480
    %v489 = vld [vmem:[%s2] sm:$0xf]
    %v490 = vld [vmem:[%s2 + $0x4] sm:$0xf]
    %v491 = vld [vmem:[%s2 + $0x8] sm:$0xf]
    %v492 = vld [vmem:[%s2 + $0xc] sm:$0xf]
    %v493 = vperm.slane %v25, 1
    %v498 = vunpack.c.l.b16 %v489
    %v499 = vunpack.c.l.b16 %v490
    %v500 = vunpack.c.l.b16 %v491
    %v501 = vunpack.c.l.b16 %v492
    %v502 = vpack.c.b16 %v499, %v498
    %v503 = vpack.c.b16 %v501, %v500
    %v506 = vsel %vm28, %v488, 0
    %508 = vmatpush.bf16.msra.mxu0 0
    %509 = vmatpush.bf16.msra.mxu0 0
    %510 = vmatpush.bf16.msra.mxu0 0
    %511 = vmatpush.bf16.msra.mxu0 0
    %512 = vmatpush.bf16.msra.mxu0 0
    %513 = vmatpush.bf16.msra.mxu0 0
    %514 = vmatpush.bf16.msra.mxu0 %v503
    %515 = vmatpush.bf16.msra.mxu0 %v502
    %516 = vmatmul.bf16.gmra.mxu0 %v506
    %v517 = vpop.f32.mrf.mxu0
    %v518 = vadd.f32 %v493, %v517
    %v519 = vpop.f32.mrf.mxu0
    %v520 = vadd.f32 %v493, %v519
    %521 = vdwg.mxu0
    %v522 = vadd.f32 %v26, %v518
    %v523 = vadd.f32 %v27, %v520
    %v524 = vsel %vm28, %v522, 0.0
    %525 = vadd.xlane.f32.xlu0 %v524
    %v526 = vpop.xlane.xlu0 %525
    %v527 = vsel %vm28, %v523, 0.0
    %528 = vadd.xlane.f32.xlu0 %v527
    %v529 = vpop.xlane.xlu0 %528
    %v530 = vmul.f32 %v526, %v41
    %v531 = vmul.f32 %v529, %v41
    %v532 = vsub.f32 %v522, %v530
    %v533 = vsub.f32 %v523, %v531
    %v534 = vmul.f32 %v532, %v532
    %v535 = vmul.f32 %v533, %v533
    %v536 = vsel %vm28, %v534, 0.0
    %537 = vadd.xlane.f32.xlu0 %v536
    %v538 = vpop.xlane.xlu0 %537
    %v539 = vsel %vm28, %v535, 0.0
    %540 = vadd.xlane.f32.xlu0 %v539
    %v541 = vpop.xlane.xlu0 %540
    %v542 = vmul.f32 %v538, %v41
    %v543 = vmul.f32 %v541, %v41
    %v544 = vadd.f32 %v542, 1e-05
    %v545 = vadd.f32 %v543, 1e-05
    %v546 = vrsqrt.pop %v544
    %v547 = vmul.f32 %v546, %v544
    %v548 = vmul.f32 %v547, %v546
    %v549 = vmul.f32 0.5, %v548
    %v550 = vsub.f32 1.5, %v549
    %v551 = vmul.f32 %v546, %v550
    %vm552 = vweird.f32 %v544
    %vm553 = vweird.f32 %v546
    %vm554 = vmor %vm552, %vm553
    %v555 = vsel %vm554, %v546, %v551
    %v556 = vrsqrt.pop %v545
    %v557 = vmul.f32 %v556, %v545
    %v558 = vmul.f32 %v557, %v556
    %v559 = vmul.f32 0.5, %v558
    %v560 = vsub.f32 1.5, %v559
    %v561 = vmul.f32 %v556, %v560
    %vm562 = vweird.f32 %v545
    %vm563 = vweird.f32 %v556
    %vm564 = vmor %vm562, %vm563
    %v565 = vsel %vm564, %v556, %v561
    %v566 = vmul.f32 %v532, %v555
    %v567 = vmul.f32 %v533, %v565
    %v568 = vmul.f32 %v566, %v80
    %v569 = vmul.f32 %v567, %v80
    %v570 = vadd.f32 %v568, %v83
    %v571 = vadd.f32 %v569, %v83
    %v572 = vpack.c.bf16 %v571, %v570
    %v573 = vld [vmem:[%s3] sm:$0xf]
    %v574 = vld [vmem:[%s3 + $0x4] sm:$0xf]
    %v575 = vld [vmem:[%s3 + $0x8] sm:$0xf]
    %v576 = vld [vmem:[%s3 + $0xc] sm:$0xf]
    %v577 = vperm.slane %v25, 2
    %v582 = vunpack.c.l.b16 %v573
    %v583 = vunpack.c.l.b16 %v574
    %v584 = vunpack.c.l.b16 %v575
    %v585 = vunpack.c.l.b16 %v576
    %v586 = vpack.c.b16 %v583, %v582
    %v587 = vpack.c.b16 %v585, %v584
    %v591 = vsel %vm28, %v572, 0
    %593 = vmatpush.bf16.msra.mxu0 0
    %594 = vmatpush.bf16.msra.mxu0 0
    %595 = vmatpush.bf16.msra.mxu0 0
    %596 = vmatpush.bf16.msra.mxu0 0
    %597 = vmatpush.bf16.msra.mxu0 0
    %598 = vmatpush.bf16.msra.mxu0 0
    %599 = vmatpush.bf16.msra.mxu0 %v587
    %600 = vmatpush.bf16.msra.mxu0 %v586
    %601 = vmatmul.bf16.gmra.mxu0 %v591
    %v602 = vpop.f32.mrf.mxu0
    %v603 = vadd.f32 %v577, %v602
    %v604 = vpop.f32.mrf.mxu0
    %v605 = vadd.f32 %v577, %v604
    %606 = vdwg.mxu0
    %v607 = vmax.f32 %v603, 0.0
    %v608 = vmax.f32 %v605, 0.0
    %v609 = vpack.c.bf16 %v608, %v607
    %v610 = vld [vmem:[%s4] sm:$0xf]
    %v611 = vld [vmem:[%s4 + $0x4] sm:$0xf]
    %v612 = vld [vmem:[%s4 + $0x8] sm:$0xf]
    %v613 = vld [vmem:[%s4 + $0xc] sm:$0xf]
    %v614 = vld [vmem:[%s4 + $0x10] sm:$0xf]
    %v615 = vld [vmem:[%s4 + $0x14] sm:$0xf]
    %v616 = vld [vmem:[%s4 + $0x18] sm:$0xf]
    %v617 = vld [vmem:[%s4 + $0x1c] sm:$0xf]
    %v618 = vperm.slane %v25, 3
    %v627 = vunpack.c.l.b16 %v610
    %v628 = vunpack.c.l.b16 %v611
    %v629 = vunpack.c.l.b16 %v612
    %v630 = vunpack.c.l.b16 %v613
    %v631 = vunpack.c.l.b16 %v614
    %v632 = vunpack.c.l.b16 %v615
    %v633 = vunpack.c.l.b16 %v616
    %v634 = vunpack.c.l.b16 %v617
    %v635 = vpack.c.b16 %v628, %v627
    %v636 = vpack.c.b16 %v630, %v629
    %v637 = vpack.c.b16 %v632, %v631
    %v638 = vpack.c.b16 %v634, %v633
    %vm643 = vcmask 523264
    %v645 = vsel %vm643, %v609, 0
    %647 = vmatpush.bf16.msra.mxu0 0
    %648 = vmatpush.bf16.msra.mxu0 0
    %649 = vmatpush.bf16.msra.mxu0 0
    %650 = vmatpush.bf16.msra.mxu0 0
    %651 = vmatpush.bf16.msra.mxu0 %v638
    %652 = vmatpush.bf16.msra.mxu0 %v637
    %653 = vmatpush.bf16.msra.mxu0 %v636
    %654 = vmatpush.bf16.msra.mxu0 %v635
    %655 = vmatmul.bf16.gmra.mxu0 %v645
    %v656 = vpop.f32.mrf.mxu0
    %v657 = vadd.f32 %v618, %v656
    %v658 = vpop.f32.mrf.mxu0
    %v659 = vadd.f32 %v618, %v658
    %660 = vdwg.mxu0
    %v661 = vadd.f32 %v570, %v657
    %v662 = vadd.f32 %v571, %v659
    %v663 = vsel %vm28, %v661, 0.0
    %664 = vadd.xlane.f32.xlu0 %v663
    %v665 = vpop.xlane.xlu0 %664
    %v666 = vsel %vm28, %v662, 0.0
    %667 = vadd.xlane.f32.xlu0 %v666
    %v668 = vpop.xlane.xlu0 %667
    %v669 = vmul.f32 %v665, %v41
    %v670 = vmul.f32 %v668, %v41
    %v671 = vsub.f32 %v661, %v669
    %v672 = vsub.f32 %v662, %v670
    %v673 = vmul.f32 %v671, %v671
    %v674 = vmul.f32 %v672, %v672
    %v675 = vsel %vm28, %v673, 0.0
    %676 = vadd.xlane.f32.xlu0 %v675
    %v677 = vpop.xlane.xlu0 %676
    %v678 = vsel %vm28, %v674, 0.0
    %679 = vadd.xlane.f32.xlu0 %v678
    %v680 = vpop.xlane.xlu0 %679
    %v681 = vmul.f32 %v677, %v41
    %v682 = vmul.f32 %v680, %v41
    %v683 = vadd.f32 %v681, 1e-05
    %v684 = vadd.f32 %v682, 1e-05
    %v685 = vrsqrt.pop %v683
    %v686 = vmul.f32 %v685, %v683
    %v687 = vmul.f32 %v686, %v685
    %v688 = vmul.f32 0.5, %v687
    %v689 = vsub.f32 1.5, %v688
    %v690 = vmul.f32 %v685, %v689
    %vm691 = vweird.f32 %v683
    %vm692 = vweird.f32 %v685
    %vm693 = vmor %vm691, %vm692
    %v694 = vsel %vm693, %v685, %v690
    %v695 = vrsqrt.pop %v684
    %v696 = vmul.f32 %v695, %v684
    %v697 = vmul.f32 %v696, %v695
    %v698 = vmul.f32 0.5, %v697
    %v699 = vsub.f32 1.5, %v698
    %v700 = vmul.f32 %v695, %v699
    %vm701 = vweird.f32 %v684
    %vm702 = vweird.f32 %v695
    %vm703 = vmor %vm701, %vm702
    %v704 = vsel %vm703, %v695, %v700
    %v705 = vmul.f32 %v671, %v694
    %v706 = vmul.f32 %v672, %v704
    %v707 = vperm.slane %v25, 6
    %v708 = vmul.f32 %v705, %v707
    %v709 = vmul.f32 %v706, %v707
    %v710 = vperm.slane %v25, 7
    %v711 = vadd.f32 %v708, %v710
    %v712 = vadd.f32 %v709, %v710
    %713 = vst.msk [vmem:[#allocation2] sm:$0xff] %vm28, %v711
    %714 = vst.msk [vmem:[#allocation2 + $0x8] sm:$0xff] %vm28, %v712
    // Predicated region
    $region26: #{dev_transformer_encoder_layer.1} parent=1 // pred_check
      _
    $region27: #{dev_transformer_encoder_layer.1} parent=1 // pred_check_branch
      %716 = sbr.rel (0) target = $region29
    $region28: #{dev_transformer_encoder_layer.1} parent=1 // pred_region
      %718 = vsyncadd [#allocation3], 0
      %s719 = sshll.u32 [#allocation2], 4
      %s720 = int_to_ptr.vmem [resolvable:$true] %s719
      %s721 = sshll.u32 %s6, 4
      %s722 = int_to_ptr.hbm [resolvable:$true] %s721
      %727 = dma.vmem_to_hbm [thread:$0]  %s720, 256, %s722, [#allocation3], 128, 128, 8
    $region29: #{dev_transformer_encoder_layer.1} parent=1 // pred_fallthru
      _
    // Predicated region
    $region30: #{dev_transformer_encoder_layer.1} parent=1 // pred_check
      _
    $region31: #{dev_transformer_encoder_layer.1} parent=1 // pred_check_branch
      %729 = sbr.rel (0) target = $region33
    $region32: #{dev_transformer_encoder_layer.1} parent=1 // pred_region
      %731 = dma.done [#allocation3], 256
    $region33: #{dev_transformer_encoder_layer.1} parent=1 // pred_fallthru
      _
    %732 = vsyncpa [#allocation3], 1

</llo_original>
